<compile_context>
chip_gen: v7x
topology: tpu7x:2x2x1
jax: 0.10.0
libtpu: 0.0.40
codegen_flags: <defaults>
</compile_context>

<pallas_src>
import functools

import jax
import jax.numpy as jnp
from jax import lax
from jax.experimental import pallas as pl
from jax.experimental.pallas import tpu as pltpu


def _round_up(x, m):
    return (x + m - 1) // m * m


def _pos_emb_kernel(seed_ref, ids_ref, table_ref, out_ref, *, p, training):
    tile_n, hidden = out_ref.shape
    max_pos = table_ref.shape[0]

    # Gather TILE_N rows from the VMEM-resident table via a one-hot matmul on
    # the MXU: one_hot[r, v] = (ids[r] == v).  HIGHEST precision => exact f32.
    ids = ids_ref[...]                                           # (tile_n, 1) int32
    iota = lax.broadcasted_iota(jnp.int32, (tile_n, max_pos), 1)
    one_hot = (ids == iota).astype(table_ref.dtype)
    gathered = jnp.dot(
        one_hot, table_ref[...],
        preferred_element_type=jnp.float32,
        precision=lax.Precision.HIGHEST,
    )                                                            # (tile_n, hidden) f32

    if training and p > 0.0:
        # Stateless per-element random bits: hash(seed, global element index).
        # Drawn once for the whole tile; no per-row reseeding.
        row = lax.broadcasted_iota(jnp.int32, (tile_n, hidden), 0)
        col = lax.broadcasted_iota(jnp.int32, (tile_n, hidden), 1)
        base = pl.program_id(0) * tile_n
        gidx = ((base + row) * hidden + col).astype(jnp.uint32)
        seed_u = seed_ref[0].astype(jnp.uint32)
        x = gidx ^ (seed_u * jnp.uint32(0x9E3779B9))
        x = (x ^ (x >> 16)) * jnp.uint32(0x7FEB352D)
        x = (x ^ (x >> 15)) * jnp.uint32(0x846CA68B)
        bits = x ^ (x >> 16)                                     # ~uniform uint32
        # Inverted dropout with an integer-threshold compare (keep prob = 1-p).
        threshold = jnp.uint32(min(int(p * (2.0 ** 32)), 2 ** 32 - 1))
        keep = bits >= threshold
        scale = 1.0 / (1.0 - p)
        gathered = jnp.where(keep, gathered * scale, 0.0)

    out_ref[...] = gathered.astype(out_ref.dtype)


def position_embedding(pos_ids, emb_table, seed, *, p=0.05, training=True,
                       tile_n=256):
    """pos_ids: [batch, seq] int32; emb_table: [max_pos_embed, hidden]."""
    batch, seq = pos_ids.shape
    n = batch * seq
    max_pos, hidden = emb_table.shape

    # Sublane-dense tiles: tile_n a multiple of 8, n padded to a tile multiple.
    tile_n = min(tile_n, _round_up(n, 8))
    n_pad = _round_up(n, tile_n)

    flat_ids = pos_ids.reshape(n).astype(jnp.int32)
    flat_ids = jnp.pad(flat_ids, (0, n_pad - n)).reshape(n_pad, 1)
    seed_arr = jnp.asarray([seed], dtype=jnp.int32)

    kernel = functools.partial(_pos_emb_kernel, p=float(p), training=bool(training))
    out = pl.pallas_call(
        kernel,
        out_shape=jax.ShapeDtypeStruct((n_pad, hidden), emb_table.dtype),
        grid_spec=pltpu.PrefetchScalarGridSpec(
            num_scalar_prefetch=1,                 # seed -> SMEM
            grid=(n_pad // tile_n,),
            in_specs=[
                # Tile of position ids for this grid step.
                pl.BlockSpec((tile_n, 1), lambda i, seed: (i, 0)),
                # Whole embedding table, resident in VMEM across all steps.
                pl.BlockSpec((max_pos, hidden), lambda i, seed: (0, 0)),
            ],
            out_specs=pl.BlockSpec((tile_n, hidden), lambda i, seed: (i, 0)),
        ),
        compiler_params=pltpu.CompilerParams(
            dimension_semantics=("parallel",),     # independent tiles -> 2 TCs on v7x
            vmem_limit_bytes=64 * 1024 * 1024,     # v7x-safe VMEM budget
        ),
    )(seed_arr, flat_ids, emb_table)
    return out[:n].reshape(batch, seq, hidden)


if __name__ == "__main__":
    key = jax.random.PRNGKey(0)
    k_emb, k_ids = jax.random.split(key)

    # Small shapes consistent with the module (hidden lane-aligned for TPU).
    hidden = 128
    max_pos_embed = 64
    batch, seq = 2, 8
    p = 0.05

    # nn.Embedding default init ~ N(0, 1), deterministic here.
    emb_table = jax.random.normal(k_emb, (max_pos_embed, hidden), dtype=jnp.float32)
    pos_ids = jax.random.randint(k_ids, (batch, seq), 0, max_pos_embed, dtype=jnp.int32)

    out = position_embedding(pos_ids, emb_table, seed=42, p=p, training=True)
    out = jax.block_until_ready(out)
    assert out.shape == (batch, seq, hidden)
    assert out.dtype == jnp.float32

    ref = emb_table[pos_ids.reshape(-1)].reshape(batch, seq, hidden)

    # Training: every element is either dropped (0) or the 1/(1-p)-scaled embedding.
    scaled = ref / (1.0 - p)
    ok = jnp.isclose(out, scaled, rtol=1e-4, atol=1e-5) | (out == 0.0)
    assert bool(jnp.all(ok))

    # Eval path (dropout off): kernel must reproduce a pure gather.
    out_eval = jax.block_until_ready(
        position_embedding(pos_ids, emb_table, seed=0, p=p, training=False))
    assert jnp.allclose(out_eval, ref, rtol=1e-6, atol=1e-6)

    print("KERNEL_OK")
</pallas_src>

<mosaic_0001>
module attributes {stable_mosaic.version = 11 : i64} {
  func.func @_pos_emb_kernel(%arg0: i32, %arg1: memref<1xi32, #tpu.memory_space<smem>>, %arg2: memref<16x1xi32, #tpu.memory_space<vmem>>, %arg3: memref<64x128xf32, #tpu.memory_space<vmem>>, %arg4: memref<16x128xf32, #tpu.memory_space<vmem>>) attributes {dimension_semantics = [#tpu.dimension_semantics<parallel>], iteration_bounds = array<i64: 1>, scalar_prefetch = 1 : i64, scratch_operands = 0 : i64, tpu.core_type = #tpu.core_type<tc>, window_params = [{transform_indices = @transform_0, window_bounds = array<i64: 16, 1>}, {pipeline_mode = #tpu.pipeline_mode<synchronous>, transform_indices = @transform_1, window_bounds = array<i64: 64, 128>}, {transform_indices = @transform_2, window_bounds = array<i64: 16, 128>}]} {
    %c0 = arith.constant 0 : index
    %c0_0 = arith.constant 0 : index
    %0 = vector.load %arg2[%c0, %c0_0] : memref<16x1xi32, #tpu.memory_space<vmem>>, vector<16x1xi32>
    %1 = tpu.iota {dimensions = array<i32: 1>} : vector<16x64xi32>
    %2 = vector.broadcast %0 : vector<16x1xi32> to vector<16x64xi32>
    %3 = arith.cmpi eq, %2, %1 : vector<16x64xi32>
    %4 = arith.extui %3 : vector<16x64xi1> to vector<16x64xi32>
    %5 = arith.sitofp %4 : vector<16x64xi32> to vector<16x64xf32>
    %c0_1 = arith.constant 0 : index
    %c0_2 = arith.constant 0 : index
    %6 = vector.load %arg3[%c0_1, %c0_2] : memref<64x128xf32, #tpu.memory_space<vmem>>, vector<64x128xf32>
    %cst = arith.constant dense<0.000000e+00> : vector<16x128xf32>
    %7 = tpu.matmul %5, %6, %cst {dimension_numbers = #tpu.dot_dimension_numbers<[1], [0], [0], [1], [0, 0, 1, 1], [], []>, precision = #tpu.contract_precision<fp32>} : vector<16x64xf32>, vector<64x128xf32>, vector<16x128xf32> -> vector<16x128xf32>
    %8 = tpu.iota {dimensions = array<i32: 0>} : vector<16x128xi32>
    %9 = tpu.iota {dimensions = array<i32: 1>} : vector<16x128xi32>
    %c16_i32 = arith.constant 16 : i32
    %10 = arith.muli %arg0, %c16_i32 : i32
    %11 = vector.broadcast %10 : i32 to vector<16x128xi32>
    %12 = arith.addi %11, %8 : vector<16x128xi32>
    %c128_i32 = arith.constant 128 : i32
    %13 = vector.broadcast %c128_i32 : i32 to vector<16x128xi32>
    %14 = arith.muli %12, %13 : vector<16x128xi32>
    %15 = arith.addi %14, %9 : vector<16x128xi32>
    %c0_3 = arith.constant 0 : index
    %16 = memref.load %arg1[%c0_3] : memref<1xi32, #tpu.memory_space<smem>>
    %c-1640531527_i32 = arith.constant -1640531527 : i32
    %17 = arith.muli %16, %c-1640531527_i32 : i32
    %18 = vector.broadcast %17 : i32 to vector<16x128xi32>
    %19 = arith.xori %15, %18 : vector<16x128xi32>
    %c16_i32_4 = arith.constant 16 : i32
    %20 = vector.broadcast %c16_i32_4 : i32 to vector<16x128xi32>
    %21 = arith.shrui %19, %20 : vector<16x128xi32>
    %22 = arith.xori %19, %21 : vector<16x128xi32>
    %c2146121005_i32 = arith.constant 2146121005 : i32
    %23 = vector.broadcast %c2146121005_i32 : i32 to vector<16x128xi32>
    %24 = arith.muli %22, %23 : vector<16x128xi32>
    %c15_i32 = arith.constant 15 : i32
    %25 = vector.broadcast %c15_i32 : i32 to vector<16x128xi32>
    %26 = arith.shrui %24, %25 : vector<16x128xi32>
    %27 = arith.xori %24, %26 : vector<16x128xi32>
    %c-2073254261_i32 = arith.constant -2073254261 : i32
    %28 = vector.broadcast %c-2073254261_i32 : i32 to vector<16x128xi32>
    %29 = arith.muli %27, %28 : vector<16x128xi32>
    %c16_i32_5 = arith.constant 16 : i32
    %30 = vector.broadcast %c16_i32_5 : i32 to vector<16x128xi32>
    %31 = arith.shrui %29, %30 : vector<16x128xi32>
    %32 = arith.xori %29, %31 : vector<16x128xi32>
    %c214748364_i32 = arith.constant 214748364 : i32
    %33 = vector.broadcast %c214748364_i32 : i32 to vector<16x128xi32>
    %34 = arith.cmpi uge, %32, %33 : vector<16x128xi32>
    %cst_6 = arith.constant 1.05263162 : f32
    %35 = vector.broadcast %cst_6 : f32 to vector<16x128xf32>
    %36 = arith.mulf %7, %35 : vector<16x128xf32>
    %cst_7 = arith.constant 0.000000e+00 : f32
    %37 = vector.broadcast %cst_7 : f32 to vector<16x128xf32>
    %38 = arith.select %34, %36, %37 : vector<16x128xi1>, vector<16x128xf32>
    %c0_8 = arith.constant 0 : index
    %c0_9 = arith.constant 0 : index
    %39 = vector.load %arg4[%c0_8, %c0_9] : memref<16x128xf32, #tpu.memory_space<vmem>>, vector<16x128xf32>
    tpu.vector_store %arg4[%c0_8, %c0_9], %38 {strides = array<i32>} : memref<16x128xf32, #tpu.memory_space<vmem>>, vector<16x128xf32>,
    return
  }
  func.func @transform_0(%arg0: i32, %arg1: memref<1xi32, #tpu.memory_space<smem>>) -> (i32, i32) {
    %c0_i32 = arith.constant 0 : i32
    %c0_i32_0 = arith.constant 0 : i32
    return %arg0, %c0_i32 : i32, i32
  }
  func.func @transform_1(%arg0: i32, %arg1: memref<1xi32, #tpu.memory_space<smem>>) -> (i32, i32) {
    %c0_i32 = arith.constant 0 : i32
    %c0_i32_0 = arith.constant 0 : i32
    %c0_i32_1 = arith.constant 0 : i32
    return %c0_i32, %c0_i32_0 : i32, i32
  }
  func.func @transform_2(%arg0: i32, %arg1: memref<1xi32, #tpu.memory_space<smem>>) -> (i32, i32) {
    %c0_i32 = arith.constant 0 : i32
    %c0_i32_0 = arith.constant 0 : i32
    return %arg0, %c0_i32 : i32, i32
  }
}

</mosaic_0001>

<llo_original>
// kernel: tpu_custom_call.1
$region0: #{tpu_custom_call.1}
  #allocation0 [shape = 'u32[]', space=smem, size = 0x4, offset = 0x4, fixed_abs, tag = 'smem constant byte address 0x4 - core index']
  #allocation1 [shape = 'u32[144,128]{1,0:T(1,128)}', space=vmem, size = 0x12000, scoped, tag = 'internal scratch']
  #allocation2 [shape = 's32[1]{0}', space=sflag, size = 0x4, scoped, tag = 'scoped memory for tpu_custom_call.1']
  #allocation3 [shape = 's32[1]{0:T(128)S(6)}', space=smem, size = 0x200, scoped, tag = 'prefetched SMEM operand 0']
  %s0 = inlined_call_operand.<no memory space> [shape: s32[1], index: 0, kind: input, shape index: {}]
  %s1 = inlined_call_operand.hbm [shape: s32[16,1], index: 1, kind: input, shape index: {}]
  %s2 = inlined_call_operand.hbm [shape: f32[64,128], index: 2, kind: input, shape index: {}]
  %s3 = inlined_call_operand.hbm [shape: f32[16,128], index: 3, kind: output, shape index: {}]
  %s4 = sld [smem:[#allocation0]]
  $region26: #{tpu_custom_call.1} parent=0
    _
  %s6 = ssub.s32 1, %s4
  %s7 = scalar_select 0, %s6, %s4
  %8 = sst [smem:[#allocation3]] %s0
  $region1: #{tpu_custom_call.1} parent=0
    #allocation4 [shape = 'u8[8192]{0}', space=vmem, size = 0x2000, scoped, tag = 'input window, operand 1, single buffered']
    #allocation5 [shape = 's32[1]{0}', space=sflag, size = 0x4, scoped, tag = 'scoped memory for tpu_custom_call.1']
    #allocation6 [shape = 's32[1]{0}', space=sflag, size = 0x4, scoped, tag = 'scoped memory for tpu_custom_call.1']
    #allocation7 [shape = 'u8[32768]{0}', space=vmem, size = 0x8000, scoped, tag = 'input window, operand 2, single buffered']
    #allocation8 [shape = 's32[1]{0}', space=sflag, size = 0x4, scoped, tag = 'scoped memory for tpu_custom_call.1']
    #allocation9 [shape = 'u8[8192]{0}', space=vmem, size = 0x2000, scoped, tag = 'output window, operand 0, single buffered']
    %9 = vsyncpa [#allocation5], 0
    %10 = vsyncpa [#allocation8], 0
    %11 = vsyncpa [#allocation6], 0
    // Predicated region
    $region2: #{tpu_custom_call.1} parent=1 // pred_check
      _
    $region3: #{tpu_custom_call.1} parent=1 // pred_check_branch
      %13 = sbr.rel (0) target = $region5
    $region4: #{tpu_custom_call.1} parent=1 // pred_region
      %s15 = ssub.s32 256, 256
      %16 = vsyncadd [#allocation5], %s15
      %s17 = sshll.u32 [#allocation4], 4
      %s18 = int_to_ptr.vmem [resolvable:$true] %s17
      %23 = dma.hbm_to_vmem [thread:$0]  %s1, 256, %s18, [#allocation5], 128, 128, 8
    $region5: #{tpu_custom_call.1} parent=1 // pred_fallthru
      _
    // Predicated region
    $region6: #{tpu_custom_call.1} parent=1 // pred_check
      _
    $region7: #{tpu_custom_call.1} parent=1 // pred_check_branch
      %25 = sbr.rel (0) target = $region9
    $region8: #{tpu_custom_call.1} parent=1 // pred_region
      %s27 = ssub.s32 1024, 1024
      %28 = vsyncadd [#allocation8], %s27
      %s29 = sshll.u32 [#allocation7], 4
      %s30 = int_to_ptr.vmem [resolvable:$true] %s29
      %35 = dma.hbm_to_vmem [thread:$0]  %s2, 1024, %s30, [#allocation8], 128, 128, 8
    $region9: #{tpu_custom_call.1} parent=1 // pred_fallthru
      _
    // Predicated region
    $region10: #{tpu_custom_call.1} parent=1 // pred_check
      _
    $region11: #{tpu_custom_call.1} parent=1 // pred_check_branch
      %37 = sbr.rel (0) target = $region13
    $region12: #{tpu_custom_call.1} parent=1 // pred_region
      %38 = dma.done [#allocation5], 256
    $region13: #{tpu_custom_call.1} parent=1 // pred_fallthru
      _
    // Predicated region
    $region14: #{tpu_custom_call.1} parent=1 // pred_check
      _
    $region15: #{tpu_custom_call.1} parent=1 // pred_check_branch
      %40 = sbr.rel (0) target = $region17
    $region16: #{tpu_custom_call.1} parent=1 // pred_region
      %41 = dma.done [#allocation8], 1024
    $region17: #{tpu_custom_call.1} parent=1 // pred_fallthru
      _
    %v42 = vld [vmem:[#allocation4] sm:$0xff]
    %v43 = vld [vmem:[#allocation4 + $0x8] sm:$0xff]
    %v44 = vlaneseq
    %v45 = vand.u32 %v44, 127
    %46 = vset.pattern.permute.xlu0 0
    %47 = vperm.xlu0 %46, %v42
    %v48 = vpop.permute.xlu0 %47
    %49 = vset.pattern.permute.xlu0 0
    %50 = vperm.xlu0 %49, %v43
    %v51 = vpop.permute.xlu0 %50
    %vm52 = vcmp.eq.s32.totalorder %v48, %v45
    %vm53 = vcmp.eq.s32.totalorder %v51, %v45
    %v54 = vsel %vm52, 1, 0
    %v55 = vsel %vm53, 1, 0
    %v56 = vcvt.s32.f32 %v54
    %v57 = vcvt.s32.f32 %v55
    %v58 = vld [vmem:[#allocation7] sm:$0xff]
    %v59 = vld [vmem:[#allocation7 + $0x8] sm:$0xff]
    %v60 = vld [vmem:[#allocation7 + $0x10] sm:$0xff]
    %v61 = vld [vmem:[#allocation7 + $0x18] sm:$0xff]
    %v62 = vld [vmem:[#allocation7 + $0x20] sm:$0xff]
    %v63 = vld [vmem:[#allocation7 + $0x28] sm:$0xff]
    %v64 = vld [vmem:[#allocation7 + $0x30] sm:$0xff]
    %v65 = vld [vmem:[#allocation7 + $0x38] sm:$0xff]
    %vm66 = vcmask 523264
    %v68 = vsel %vm66, %v56, 0
    %v71 = vsel %vm66, %v57, 0
    %73 = vmatprep.subr.mxu0 0.0
    %v74 = vand.u32 %v58, 4294901760
    %75 = vmatpush1.msra.mxu0 %v74
    %76 = vmatprep.subr.mxu0 0.0
    %v77 = vand.u32 %v59, 4294901760
    %78 = vmatpush1.msra.mxu0 %v77
    %79 = vmatprep.subr.mxu0 0.0
    %v80 = vand.u32 %v60, 4294901760
    %81 = vmatpush1.msra.mxu0 %v80
    %82 = vmatprep.subr.mxu0 0.0
    %v83 = vand.u32 %v61, 4294901760
    %84 = vmatpush1.msra.mxu0 %v83
    %85 = vmatprep.subr.mxu0 0.0
    %v86 = vand.u32 %v62, 4294901760
    %87 = vmatpush1.msra.mxu0 %v86
    %88 = vmatprep.subr.mxu0 0.0
    %v89 = vand.u32 %v63, 4294901760
    %90 = vmatpush1.msra.mxu0 %v89
    %91 = vmatprep.subr.mxu0 0.0
    %v92 = vand.u32 %v64, 4294901760
    %93 = vmatpush1.msra.mxu0 %v92
    %94 = vmatprep.subr.mxu0 0.0
    %v95 = vand.u32 %v65, 4294901760
    %96 = vmatpush1.msra.mxu0 %v95
    %97 = vmatprep.subr.mxu0 0.0
    %98 = vmatpush1.msra.mxu0 0.0
    %99 = vmatprep.subr.mxu0 0.0
    %100 = vmatpush1.msra.mxu0 0.0
    %101 = vmatprep.subr.mxu0 0.0
    %102 = vmatpush1.msra.mxu0 0.0
    %103 = vmatprep.subr.mxu0 0.0
    %104 = vmatpush1.msra.mxu0 0.0
    %105 = vmatprep.subr.mxu0 0.0
    %106 = vmatpush1.msra.mxu0 0.0
    %107 = vmatprep.subr.mxu0 0.0
    %108 = vmatpush1.msra.mxu0 0.0
    %109 = vmatprep.subr.mxu0 0.0
    %110 = vmatpush1.msra.mxu0 0.0
    %111 = vmatprep.subr.mxu0 0.0
    %112 = vmatpush1.msra.mxu0 0.0
    %113 = vmatprep.subr.mxu0 0.0
    %114 = vmatpush1.msra.mxu0 0.0
    %115 = vmatprep.subr.mxu0 0.0
    %116 = vmatpush1.msra.mxu0 0.0
    %117 = vmatprep.subr.mxu0 0.0
    %118 = vmatpush1.msra.mxu0 0.0
    %119 = vmatprep.subr.mxu0 0.0
    %120 = vmatpush1.msra.mxu0 0.0
    %121 = vmatprep.subr.mxu0 0.0
    %122 = vmatpush1.msra.mxu0 0.0
    %123 = vmatprep.subr.mxu0 0.0
    %124 = vmatpush1.msra.mxu0 0.0
    %125 = vmatprep.subr.mxu0 0.0
    %126 = vmatpush1.msra.mxu0 0.0
    %127 = vmatprep.subr.mxu0 0.0
    %128 = vmatpush1.msra.mxu0 0.0
    %129 = vmatprep.subr.mxu0 0.0
    %130 = vmatpush1.msra.mxu0 0.0
    %131 = vmatprep.subr.mxu0 0.0
    %132 = vmatpush1.msra.mxu0 0.0
    %133 = vmatprep.subr.mxu0 0.0
    %134 = vmatpush1.msra.mxu0 0.0
    %135 = vmatprep.subr.mxu0 0.0
    %136 = vmatpush1.msra.mxu0 0.0
    %137 = vmatprep.subr.mxu0 0.0
    %138 = vmatpush1.msra.mxu0 0.0
    %139 = vmatprep.subr.mxu0 0.0
    %140 = vmatpush1.msra.mxu0 0.0
    %141 = vmatprep.subr.mxu0 0.0
    %142 = vmatpush1.msra.mxu0 0.0
    %143 = vmatprep.subr.mxu0 0.0
    %144 = vmatpush1.msra.mxu0 0.0
    %145 = vmatprep.mubr.f32.mxu0 0.0
    %v146 = vand.u32 %v68, 4294901760
    %v147 = vsub.f32 %v68, %v146
    %v148 = vand.u32 %v147, 4294901760
    %v149 = vsub.f32 %v147, %v148
    %v150 = vand.u32 %v149, 4294901760
    %151 = vmatmul.mubr.f32.gmra.mrb[0].mxu0 %v150
    %v152 = vpop.f32.mrb[0].mxu0
    %v153 = vadd.f32 0.0, %v152
    %v154 = vpop.f32.mrb[0].mxu0
    %155 = vmatprep.mubr.f32.mxu0 0.0
    %v156 = vand.u32 %v71, 4294901760
    %v157 = vsub.f32 %v71, %v156
    %v158 = vand.u32 %v157, 4294901760
    %v159 = vsub.f32 %v157, %v158
    %v160 = vand.u32 %v159, 4294901760
    %161 = vmatmul.mubr.f32.gmra.mrb[0].mxu0 %v160
    %v162 = vpop.f32.mrb[0].mxu0
    %v163 = vadd.f32 0.0, %v162
    %v164 = vpop.f32.mrb[0].mxu0
    %165 = vdwg.mxu0
    %166 = vmatprep.subr.mxu0 0.0
    %v167 = vand.u32 %v58, 4294901760
    %v168 = vsub.f32 %v58, %v167
    %v169 = vand.u32 %v168, 4294901760
    %v170 = vsub.f32 %v168, %v169
    %v171 = vand.u32 %v170, 4294901760
    %172 = vmatpush1.msra.mxu0 %v171
    %173 = vmatprep.subr.mxu0 0.0
    %v174 = vand.u32 %v59, 4294901760
    %v175 = vsub.f32 %v59, %v174
    %v176 = vand.u32 %v175, 4294901760
    %v177 = vsub.f32 %v175, %v176
    %v178 = vand.u32 %v177, 4294901760
    %179 = vmatpush1.msra.mxu0 %v178
    %180 = vmatprep.subr.mxu0 0.0
    %v181 = vand.u32 %v60, 4294901760
    %v182 = vsub.f32 %v60, %v181
    %v183 = vand.u32 %v182, 4294901760
    %v184 = vsub.f32 %v182, %v183
    %v185 = vand.u32 %v184, 4294901760
    %186 = vmatpush1.msra.mxu0 %v185
    %187 = vmatprep.subr.mxu0 0.0
    %v188 = vand.u32 %v61, 4294901760
    %v189 = vsub.f32 %v61, %v188
    %v190 = vand.u32 %v189, 4294901760
    %v191 = vsub.f32 %v189, %v190
    %v192 = vand.u32 %v191, 4294901760
    %193 = vmatpush1.msra.mxu0 %v192
    %194 = vmatprep.subr.mxu0 0.0
    %v195 = vand.u32 %v62, 4294901760
    %v196 = vsub.f32 %v62, %v195
    %v197 = vand.u32 %v196, 4294901760
    %v198 = vsub.f32 %v196, %v197
    %v199 = vand.u32 %v198, 4294901760
    %200 = vmatpush1.msra.mxu0 %v199
    %201 = vmatprep.subr.mxu0 0.0
    %v202 = vand.u32 %v63, 4294901760
    %v203 = vsub.f32 %v63, %v202
    %v204 = vand.u32 %v203, 4294901760
    %v205 = vsub.f32 %v203, %v204
    %v206 = vand.u32 %v205, 4294901760
    %207 = vmatpush1.msra.mxu0 %v206
    %208 = vmatprep.subr.mxu0 0.0
    %v209 = vand.u32 %v64, 4294901760
    %v210 = vsub.f32 %v64, %v209
    %v211 = vand.u32 %v210, 4294901760
    %v212 = vsub.f32 %v210, %v211
    %v213 = vand.u32 %v212, 4294901760
    %214 = vmatpush1.msra.mxu0 %v213
    %215 = vmatprep.subr.mxu0 0.0
    %v216 = vand.u32 %v65, 4294901760
    %v217 = vsub.f32 %v65, %v216
    %v218 = vand.u32 %v217, 4294901760
    %v219 = vsub.f32 %v217, %v218
    %v220 = vand.u32 %v219, 4294901760
    %221 = vmatpush1.msra.mxu0 %v220
    %222 = vmatprep.subr.mxu0 0.0
    %223 = vmatpush1.msra.mxu0 0.0
    %224 = vmatprep.subr.mxu0 0.0
    %225 = vmatpush1.msra.mxu0 0.0
    %226 = vmatprep.subr.mxu0 0.0
    %227 = vmatpush1.msra.mxu0 0.0
    %228 = vmatprep.subr.mxu0 0.0
    %229 = vmatpush1.msra.mxu0 0.0
    %230 = vmatprep.subr.mxu0 0.0
    %231 = vmatpush1.msra.mxu0 0.0
    %232 = vmatprep.subr.mxu0 0.0
    %233 = vmatpush1.msra.mxu0 0.0
    %234 = vmatprep.subr.mxu0 0.0
    %235 = vmatpush1.msra.mxu0 0.0
    %236 = vmatprep.subr.mxu0 0.0
    %237 = vmatpush1.msra.mxu0 0.0
    %238 = vmatprep.subr.mxu0 0.0
    %239 = vmatpush1.msra.mxu0 0.0
    %240 = vmatprep.subr.mxu0 0.0
    %241 = vmatpush1.msra.mxu0 0.0
    %242 = vmatprep.subr.mxu0 0.0
    %243 = vmatpush1.msra.mxu0 0.0
    %244 = vmatprep.subr.mxu0 0.0
    %245 = vmatpush1.msra.mxu0 0.0
    %246 = vmatprep.subr.mxu0 0.0
    %247 = vmatpush1.msra.mxu0 0.0
    %248 = vmatprep.subr.mxu0 0.0
    %249 = vmatpush1.msra.mxu0 0.0
    %250 = vmatprep.subr.mxu0 0.0
    %251 = vmatpush1.msra.mxu0 0.0
    %252 = vmatprep.subr.mxu0 0.0
    %253 = vmatpush1.msra.mxu0 0.0
    %254 = vmatprep.subr.mxu0 0.0
    %255 = vmatpush1.msra.mxu0 0.0
    %256 = vmatprep.subr.mxu0 0.0
    %257 = vmatpush1.msra.mxu0 0.0
    %258 = vmatprep.subr.mxu0 0.0
    %259 = vmatpush1.msra.mxu0 0.0
    %260 = vmatprep.subr.mxu0 0.0
    %261 = vmatpush1.msra.mxu0 0.0
    %262 = vmatprep.subr.mxu0 0.0
    %263 = vmatpush1.msra.mxu0 0.0
    %264 = vmatprep.subr.mxu0 0.0
    %265 = vmatpush1.msra.mxu0 0.0
    %266 = vmatprep.subr.mxu0 0.0
    %267 = vmatpush1.msra.mxu0 0.0
    %268 = vmatprep.subr.mxu0 0.0
    %269 = vmatpush1.msra.mxu0 0.0
    %270 = vmatprep.mubr.f32.mxu0 0.0
    %v271 = vand.u32 %v68, 4294901760
    %272 = vmatmul.mubr.f32.gmra.mrb[0].mxu0 %v271
    %v273 = vpop.f32.mrb[0].mxu0
    %v274 = vadd.f32 %v153, %v273
    %v275 = vpop.f32.mrb[0].mxu0
    %276 = vmatprep.mubr.f32.mxu0 0.0
    %v277 = vand.u32 %v71, 4294901760
    %278 = vmatmul.mubr.f32.gmra.mrb[0].mxu0 %v277
    %v279 = vpop.f32.mrb[0].mxu0
    %v280 = vadd.f32 %v163, %v279
    %v281 = vpop.f32.mrb[0].mxu0
    %282 = vdwg.mxu0
    %283 = vmatprep.subr.mxu0 0.0
    %v284 = vand.u32 %v58, 4294901760
    %v285 = vsub.f32 %v58, %v284
    %286 = vmatpush1.msra.mxu0 %v285
    %287 = vmatprep.subr.mxu0 0.0
    %v288 = vand.u32 %v59, 4294901760
    %v289 = vsub.f32 %v59, %v288
    %290 = vmatpush1.msra.mxu0 %v289
    %291 = vmatprep.subr.mxu0 0.0
    %v292 = vand.u32 %v60, 4294901760
    %v293 = vsub.f32 %v60, %v292
    %294 = vmatpush1.msra.mxu0 %v293
    %295 = vmatprep.subr.mxu0 0.0
    %v296 = vand.u32 %v61, 4294901760
    %v297 = vsub.f32 %v61, %v296
    %298 = vmatpush1.msra.mxu0 %v297
    %299 = vmatprep.subr.mxu0 0.0
    %v300 = vand.u32 %v62, 4294901760
    %v301 = vsub.f32 %v62, %v300
    %302 = vmatpush1.msra.mxu0 %v301
    %303 = vmatprep.subr.mxu0 0.0
    %v304 = vand.u32 %v63, 4294901760
    %v305 = vsub.f32 %v63, %v304
    %306 = vmatpush1.msra.mxu0 %v305
    %307 = vmatprep.subr.mxu0 0.0
    %v308 = vand.u32 %v64, 4294901760
    %v309 = vsub.f32 %v64, %v308
    %310 = vmatpush1.msra.mxu0 %v309
    %311 = vmatprep.subr.mxu0 0.0
    %v312 = vand.u32 %v65, 4294901760
    %v313 = vsub.f32 %v65, %v312
    %314 = vmatpush1.msra.mxu0 %v313
    %315 = vmatprep.subr.mxu0 0.0
    %316 = vmatpush1.msra.mxu0 0.0
    %317 = vmatprep.subr.mxu0 0.0
    %318 = vmatpush1.msra.mxu0 0.0
    %319 = vmatprep.subr.mxu0 0.0
    %320 = vmatpush1.msra.mxu0 0.0
    %321 = vmatprep.subr.mxu0 0.0
    %322 = vmatpush1.msra.mxu0 0.0
    %323 = vmatprep.subr.mxu0 0.0
    %324 = vmatpush1.msra.mxu0 0.0
    %325 = vmatprep.subr.mxu0 0.0
    %326 = vmatpush1.msra.mxu0 0.0
    %327 = vmatprep.subr.mxu0 0.0
    %328 = vmatpush1.msra.mxu0 0.0
    %329 = vmatprep.subr.mxu0 0.0
    %330 = vmatpush1.msra.mxu0 0.0
    %331 = vmatprep.subr.mxu0 0.0
    %332 = vmatpush1.msra.mxu0 0.0
    %333 = vmatprep.subr.mxu0 0.0
    %334 = vmatpush1.msra.mxu0 0.0
    %335 = vmatprep.subr.mxu0 0.0
    %336 = vmatpush1.msra.mxu0 0.0
    %337 = vmatprep.subr.mxu0 0.0
    %338 = vmatpush1.msra.mxu0 0.0
    %339 = vmatprep.subr.mxu0 0.0
    %340 = vmatpush1.msra.mxu0 0.0
    %341 = vmatprep.subr.mxu0 0.0
    %342 = vmatpush1.msra.mxu0 0.0
    %343 = vmatprep.subr.mxu0 0.0
    %344 = vmatpush1.msra.mxu0 0.0
    %345 = vmatprep.subr.mxu0 0.0
    %346 = vmatpush1.msra.mxu0 0.0
    %347 = vmatprep.subr.mxu0 0.0
    %348 = vmatpush1.msra.mxu0 0.0
    %349 = vmatprep.subr.mxu0 0.0
    %350 = vmatpush1.msra.mxu0 0.0
    %351 = vmatprep.subr.mxu0 0.0
    %352 = vmatpush1.msra.mxu0 0.0
    %353 = vmatprep.subr.mxu0 0.0
    %354 = vmatpush1.msra.mxu0 0.0
    %355 = vmatprep.subr.mxu0 0.0
    %356 = vmatpush1.msra.mxu0 0.0
    %357 = vmatprep.subr.mxu0 0.0
    %358 = vmatpush1.msra.mxu0 0.0
    %359 = vmatprep.subr.mxu0 0.0
    %360 = vmatpush1.msra.mxu0 0.0
    %361 = vmatprep.subr.mxu0 0.0
    %362 = vmatpush1.msra.mxu0 0.0
    %363 = vmatprep.mubr.f32.mxu0 0.0
    %v364 = vand.u32 %v68, 4294901760
    %v365 = vsub.f32 %v68, %v364
    %366 = vmatmul.mubr.f32.gmra.mrb[0].mxu0 %v365
    %v367 = vpop.f32.mrb[0].mxu0
    %v368 = vadd.f32 %v274, %v367
    %v369 = vpop.f32.mrb[0].mxu0
    %370 = vmatprep.mubr.f32.mxu0 0.0
    %v371 = vand.u32 %v71, 4294901760
    %v372 = vsub.f32 %v71, %v371
    %373 = vmatmul.mubr.f32.gmra.mrb[0].mxu0 %v372
    %v374 = vpop.f32.mrb[0].mxu0
    %v375 = vadd.f32 %v280, %v374
    %v376 = vpop.f32.mrb[0].mxu0
    %377 = vdwg.mxu0
    %378 = vmatprep.subr.mxu0 0.0
    %v379 = vand.u32 %v58, 4294901760
    %380 = vmatpush1.msra.mxu0 %v379
    %381 = vmatprep.subr.mxu0 0.0
    %v382 = vand.u32 %v59, 4294901760
    %383 = vmatpush1.msra.mxu0 %v382
    %384 = vmatprep.subr.mxu0 0.0
    %v385 = vand.u32 %v60, 4294901760
    %386 = vmatpush1.msra.mxu0 %v385
    %387 = vmatprep.subr.mxu0 0.0
    %v388 = vand.u32 %v61, 4294901760
    %389 = vmatpush1.msra.mxu0 %v388
    %390 = vmatprep.subr.mxu0 0.0
    %v391 = vand.u32 %v62, 4294901760
    %392 = vmatpush1.msra.mxu0 %v391
    %393 = vmatprep.subr.mxu0 0.0
    %v394 = vand.u32 %v63, 4294901760
    %395 = vmatpush1.msra.mxu0 %v394
    %396 = vmatprep.subr.mxu0 0.0
    %v397 = vand.u32 %v64, 4294901760
    %398 = vmatpush1.msra.mxu0 %v397
    %399 = vmatprep.subr.mxu0 0.0
    %v400 = vand.u32 %v65, 4294901760
    %401 = vmatpush1.msra.mxu0 %v400
    %402 = vmatprep.subr.mxu0 0.0
    %403 = vmatpush1.msra.mxu0 0.0
    %404 = vmatprep.subr.mxu0 0.0
    %405 = vmatpush1.msra.mxu0 0.0
    %406 = vmatprep.subr.mxu0 0.0
    %407 = vmatpush1.msra.mxu0 0.0
    %408 = vmatprep.subr.mxu0 0.0
    %409 = vmatpush1.msra.mxu0 0.0
    %410 = vmatprep.subr.mxu0 0.0
    %411 = vmatpush1.msra.mxu0 0.0
    %412 = vmatprep.subr.mxu0 0.0
    %413 = vmatpush1.msra.mxu0 0.0
    %414 = vmatprep.subr.mxu0 0.0
    %415 = vmatpush1.msra.mxu0 0.0
    %416 = vmatprep.subr.mxu0 0.0
    %417 = vmatpush1.msra.mxu0 0.0
    %418 = vmatprep.subr.mxu0 0.0
    %419 = vmatpush1.msra.mxu0 0.0
    %420 = vmatprep.subr.mxu0 0.0
    %421 = vmatpush1.msra.mxu0 0.0
    %422 = vmatprep.subr.mxu0 0.0
    %423 = vmatpush1.msra.mxu0 0.0
    %424 = vmatprep.subr.mxu0 0.0
    %425 = vmatpush1.msra.mxu0 0.0
    %426 = vmatprep.subr.mxu0 0.0
    %427 = vmatpush1.msra.mxu0 0.0
    %428 = vmatprep.subr.mxu0 0.0
    %429 = vmatpush1.msra.mxu0 0.0
    %430 = vmatprep.subr.mxu0 0.0
    %431 = vmatpush1.msra.mxu0 0.0
    %432 = vmatprep.subr.mxu0 0.0
    %433 = vmatpush1.msra.mxu0 0.0
    %434 = vmatprep.subr.mxu0 0.0
    %435 = vmatpush1.msra.mxu0 0.0
    %436 = vmatprep.subr.mxu0 0.0
    %437 = vmatpush1.msra.mxu0 0.0
    %438 = vmatprep.subr.mxu0 0.0
    %439 = vmatpush1.msra.mxu0 0.0
    %440 = vmatprep.subr.mxu0 0.0
    %441 = vmatpush1.msra.mxu0 0.0
    %442 = vmatprep.subr.mxu0 0.0
    %443 = vmatpush1.msra.mxu0 0.0
    %444 = vmatprep.subr.mxu0 0.0
    %445 = vmatpush1.msra.mxu0 0.0
    %446 = vmatprep.subr.mxu0 0.0
    %447 = vmatpush1.msra.mxu0 0.0
    %448 = vmatprep.subr.mxu0 0.0
    %449 = vmatpush1.msra.mxu0 0.0
    %450 = vmatprep.mubr.f32.mxu0 0.0
    %v451 = vand.u32 %v68, 4294901760
    %v452 = vsub.f32 %v68, %v451
    %v453 = vand.u32 %v452, 4294901760
    %454 = vmatmul.mubr.f32.gmra.mrb[0].mxu0 %v453
    %v455 = vpop.f32.mrb[0].mxu0
    %v456 = vadd.f32 %v368, %v455
    %v457 = vpop.f32.mrb[0].mxu0
    %458 = vmatprep.mubr.f32.mxu0 0.0
    %v459 = vand.u32 %v71, 4294901760
    %v460 = vsub.f32 %v71, %v459
    %v461 = vand.u32 %v460, 4294901760
    %462 = vmatmul.mubr.f32.gmra.mrb[0].mxu0 %v461
    %v463 = vpop.f32.mrb[0].mxu0
    %v464 = vadd.f32 %v375, %v463
    %v465 = vpop.f32.mrb[0].mxu0
    %466 = vdwg.mxu0
    %467 = vmatprep.subr.mxu0 0.0
    %v468 = vand.u32 %v58, 4294901760
    %v469 = vsub.f32 %v58, %v468
    %v470 = vand.u32 %v469, 4294901760
    %471 = vmatpush1.msra.mxu0 %v470
    %472 = vmatprep.subr.mxu0 0.0
    %v473 = vand.u32 %v59, 4294901760
    %v474 = vsub.f32 %v59, %v473
    %v475 = vand.u32 %v474, 4294901760
    %476 = vmatpush1.msra.mxu0 %v475
    %477 = vmatprep.subr.mxu0 0.0
    %v478 = vand.u32 %v60, 4294901760
    %v479 = vsub.f32 %v60, %v478
    %v480 = vand.u32 %v479, 4294901760
    %481 = vmatpush1.msra.mxu0 %v480
    %482 = vmatprep.subr.mxu0 0.0
    %v483 = vand.u32 %v61, 4294901760
    %v484 = vsub.f32 %v61, %v483
    %v485 = vand.u32 %v484, 4294901760
    %486 = vmatpush1.msra.mxu0 %v485
    %487 = vmatprep.subr.mxu0 0.0
    %v488 = vand.u32 %v62, 4294901760
    %v489 = vsub.f32 %v62, %v488
    %v490 = vand.u32 %v489, 4294901760
    %491 = vmatpush1.msra.mxu0 %v490
    %492 = vmatprep.subr.mxu0 0.0
    %v493 = vand.u32 %v63, 4294901760
    %v494 = vsub.f32 %v63, %v493
    %v495 = vand.u32 %v494, 4294901760
    %496 = vmatpush1.msra.mxu0 %v495
    %497 = vmatprep.subr.mxu0 0.0
    %v498 = vand.u32 %v64, 4294901760
    %v499 = vsub.f32 %v64, %v498
    %v500 = vand.u32 %v499, 4294901760
    %501 = vmatpush1.msra.mxu0 %v500
    %502 = vmatprep.subr.mxu0 0.0
    %v503 = vand.u32 %v65, 4294901760
    %v504 = vsub.f32 %v65, %v503
    %v505 = vand.u32 %v504, 4294901760
    %506 = vmatpush1.msra.mxu0 %v505
    %507 = vmatprep.subr.mxu0 0.0
    %508 = vmatpush1.msra.mxu0 0.0
    %509 = vmatprep.subr.mxu0 0.0
    %510 = vmatpush1.msra.mxu0 0.0
    %511 = vmatprep.subr.mxu0 0.0
    %512 = vmatpush1.msra.mxu0 0.0
    %513 = vmatprep.subr.mxu0 0.0
    %514 = vmatpush1.msra.mxu0 0.0
    %515 = vmatprep.subr.mxu0 0.0
    %516 = vmatpush1.msra.mxu0 0.0
    %517 = vmatprep.subr.mxu0 0.0
    %518 = vmatpush1.msra.mxu0 0.0
    %519 = vmatprep.subr.mxu0 0.0
    %520 = vmatpush1.msra.mxu0 0.0
    %521 = vmatprep.subr.mxu0 0.0
    %522 = vmatpush1.msra.mxu0 0.0
    %523 = vmatprep.subr.mxu0 0.0
    %524 = vmatpush1.msra.mxu0 0.0
    %525 = vmatprep.subr.mxu0 0.0
    %526 = vmatpush1.msra.mxu0 0.0
    %527 = vmatprep.subr.mxu0 0.0
    %528 = vmatpush1.msra.mxu0 0.0
    %529 = vmatprep.subr.mxu0 0.0
    %530 = vmatpush1.msra.mxu0 0.0
    %531 = vmatprep.subr.mxu0 0.0
    %532 = vmatpush1.msra.mxu0 0.0
    %533 = vmatprep.subr.mxu0 0.0
    %534 = vmatpush1.msra.mxu0 0.0
    %535 = vmatprep.subr.mxu0 0.0
    %536 = vmatpush1.msra.mxu0 0.0
    %537 = vmatprep.subr.mxu0 0.0
    %538 = vmatpush1.msra.mxu0 0.0
    %539 = vmatprep.subr.mxu0 0.0
    %540 = vmatpush1.msra.mxu0 0.0
    %541 = vmatprep.subr.mxu0 0.0
    %542 = vmatpush1.msra.mxu0 0.0
    %543 = vmatprep.subr.mxu0 0.0
    %544 = vmatpush1.msra.mxu0 0.0
    %545 = vmatprep.subr.mxu0 0.0
    %546 = vmatpush1.msra.mxu0 0.0
    %547 = vmatprep.subr.mxu0 0.0
    %548 = vmatpush1.msra.mxu0 0.0
    %549 = vmatprep.subr.mxu0 0.0
    %550 = vmatpush1.msra.mxu0 0.0
    %551 = vmatprep.subr.mxu0 0.0
    %552 = vmatpush1.msra.mxu0 0.0
    %553 = vmatprep.subr.mxu0 0.0
    %554 = vmatpush1.msra.mxu0 0.0
    %555 = vmatprep.mubr.f32.mxu0 0.0
    %v556 = vand.u32 %v68, 4294901760
    %557 = vmatmul.mubr.f32.gmra.mrb[0].mxu0 %v556
    %v558 = vpop.f32.mrb[0].mxu0
    %v559 = vadd.f32 %v456, %v558
    %v560 = vpop.f32.mrb[0].mxu0
    %561 = vmatprep.mubr.f32.mxu0 0.0
    %v562 = vand.u32 %v71, 4294901760
    %563 = vmatmul.mubr.f32.gmra.mrb[0].mxu0 %v562
    %v564 = vpop.f32.mrb[0].mxu0
    %v565 = vadd.f32 %v464, %v564
    %v566 = vpop.f32.mrb[0].mxu0
    %567 = vdwg.mxu0
    %568 = vmatprep.subr.mxu0 0.0
    %v569 = vand.u32 %v58, 4294901760
    %570 = vmatpush1.msra.mxu0 %v569
    %571 = vmatprep.subr.mxu0 0.0
    %v572 = vand.u32 %v59, 4294901760
    %573 = vmatpush1.msra.mxu0 %v572
    %574 = vmatprep.subr.mxu0 0.0
    %v575 = vand.u32 %v60, 4294901760
    %576 = vmatpush1.msra.mxu0 %v575
    %577 = vmatprep.subr.mxu0 0.0
    %v578 = vand.u32 %v61, 4294901760
    %579 = vmatpush1.msra.mxu0 %v578
    %580 = vmatprep.subr.mxu0 0.0
    %v581 = vand.u32 %v62, 4294901760
    %582 = vmatpush1.msra.mxu0 %v581
    %583 = vmatprep.subr.mxu0 0.0
    %v584 = vand.u32 %v63, 4294901760
    %585 = vmatpush1.msra.mxu0 %v584
    %586 = vmatprep.subr.mxu0 0.0
    %v587 = vand.u32 %v64, 4294901760
    %588 = vmatpush1.msra.mxu0 %v587
    %589 = vmatprep.subr.mxu0 0.0
    %v590 = vand.u32 %v65, 4294901760
    %591 = vmatpush1.msra.mxu0 %v590
    %592 = vmatprep.subr.mxu0 0.0
    %593 = vmatpush1.msra.mxu0 0.0
    %594 = vmatprep.subr.mxu0 0.0
    %595 = vmatpush1.msra.mxu0 0.0
    %596 = vmatprep.subr.mxu0 0.0
    %597 = vmatpush1.msra.mxu0 0.0
    %598 = vmatprep.subr.mxu0 0.0
    %599 = vmatpush1.msra.mxu0 0.0
    %600 = vmatprep.subr.mxu0 0.0
    %601 = vmatpush1.msra.mxu0 0.0
    %602 = vmatprep.subr.mxu0 0.0
    %603 = vmatpush1.msra.mxu0 0.0
    %604 = vmatprep.subr.mxu0 0.0
    %605 = vmatpush1.msra.mxu0 0.0
    %606 = vmatprep.subr.mxu0 0.0
    %607 = vmatpush1.msra.mxu0 0.0
    %608 = vmatprep.subr.mxu0 0.0
    %609 = vmatpush1.msra.mxu0 0.0
    %610 = vmatprep.subr.mxu0 0.0
    %611 = vmatpush1.msra.mxu0 0.0
    %612 = vmatprep.subr.mxu0 0.0
    %613 = vmatpush1.msra.mxu0 0.0
    %614 = vmatprep.subr.mxu0 0.0
    %615 = vmatpush1.msra.mxu0 0.0
    %616 = vmatprep.subr.mxu0 0.0
    %617 = vmatpush1.msra.mxu0 0.0
    %618 = vmatprep.subr.mxu0 0.0
    %619 = vmatpush1.msra.mxu0 0.0
    %620 = vmatprep.subr.mxu0 0.0
    %621 = vmatpush1.msra.mxu0 0.0
    %622 = vmatprep.subr.mxu0 0.0
    %623 = vmatpush1.msra.mxu0 0.0
    %624 = vmatprep.subr.mxu0 0.0
    %625 = vmatpush1.msra.mxu0 0.0
    %626 = vmatprep.subr.mxu0 0.0
    %627 = vmatpush1.msra.mxu0 0.0
    %628 = vmatprep.subr.mxu0 0.0
    %629 = vmatpush1.msra.mxu0 0.0
    %630 = vmatprep.subr.mxu0 0.0
    %631 = vmatpush1.msra.mxu0 0.0
    %632 = vmatprep.subr.mxu0 0.0
    %633 = vmatpush1.msra.mxu0 0.0
    %634 = vmatprep.subr.mxu0 0.0
    %635 = vmatpush1.msra.mxu0 0.0
    %636 = vmatprep.subr.mxu0 0.0
    %637 = vmatpush1.msra.mxu0 0.0
    %638 = vmatprep.subr.mxu0 0.0
    %639 = vmatpush1.msra.mxu0 0.0
    %640 = vmatprep.mubr.f32.mxu0 0.0
    %v641 = vand.u32 %v68, 4294901760
    %642 = vmatmul.mubr.f32.gmra.mrb[0].mxu0 %v641
    %v643 = vpop.f32.mrb[0].mxu0
    %v644 = vadd.f32 %v559, %v643
    %v645 = vpop.f32.mrb[0].mxu0
    %646 = vmatprep.mubr.f32.mxu0 0.0
    %v647 = vand.u32 %v71, 4294901760
    %648 = vmatmul.mubr.f32.gmra.mrb[0].mxu0 %v647
    %v649 = vpop.f32.mrb[0].mxu0
    %v650 = vadd.f32 %v565, %v649
    %v651 = vpop.f32.mrb[0].mxu0
    %652 = vdwg.mxu0
    %v653 = vlaneseq
    %v654 = vshrl.u32 %v653, 7
    %v655 = vadd.s32 %v654, 8
    %s656 = smul.u32 0, 16
    %v657 = vstv %s656
    %v658 = vadd.s32 %v657, %v654
    %v659 = vadd.s32 %v657, %v655
    %v660 = vmul.u32 %v658, 128
    %v661 = vmul.u32 %v659, 128
    %v662 = vadd.s32 %v660, %v45
    %v663 = vadd.s32 %v661, %v45
    %s664 = sld [smem:[#allocation3]]
    %s665 = smul.u32 %s664, 2654435769
    %v666 = vstv %s665
    %v667 = vxor.u32 %v662, %v666
    %v668 = vxor.u32 %v663, %v666
    %v669 = vshrl.u32 %v667, 16
    %v670 = vshrl.u32 %v668, 16
    %v671 = vxor.u32 %v667, %v669
    %v672 = vxor.u32 %v668, %v670
    %v673 = vmul.u32 %v671, 2146121005
    %v674 = vmul.u32 %v672, 2146121005
    %v675 = vshrl.u32 %v673, 15
    %v676 = vshrl.u32 %v674, 15
    %v677 = vxor.u32 %v673, %v675
    %v678 = vxor.u32 %v674, %v676
    %v679 = vmul.u32 %v677, 2221713035
    %v680 = vmul.u32 %v678, 2221713035
    %v681 = vshrl.u32 %v679, 16
    %v682 = vshrl.u32 %v680, 16
    %v683 = vxor.u32 %v679, %v681
    %v684 = vxor.u32 %v680, %v682
    %vm685 = vcmp.ge.u32.totalorder %v683, 214748364
    %vm686 = vcmp.ge.u32.totalorder %v684, 214748364
    %v687 = vmul.f32 %v644, 1.0526316
    %v688 = vmul.f32 %v650, 1.0526316
    %v689 = vsel %vm685, %v687, 0.0
    %v690 = vsel %vm686, %v688, 0.0
    %691 = vst [vmem:[#allocation9] sm:$0xff] %v689
    %692 = vst [vmem:[#allocation9 + $0x8] sm:$0xff] %v690
    // Predicated region
    $region18: #{tpu_custom_call.1} parent=1 // pred_check
      _
    $region19: #{tpu_custom_call.1} parent=1 // pred_check_branch
      %694 = sbr.rel (0) target = $region21
    $region20: #{tpu_custom_call.1} parent=1 // pred_region
      %s696 = ssub.s32 256, 256
      %697 = vsyncadd [#allocation6], %s696
      %s698 = sshll.u32 [#allocation9], 4
      %s699 = int_to_ptr.vmem [resolvable:$true] %s698
      %704 = dma.vmem_to_hbm [thread:$0]  %s699, 256, %s3, [#allocation6], 128, 128, 8
    $region21: #{tpu_custom_call.1} parent=1 // pred_fallthru
      _
    // Predicated region
    $region22: #{tpu_custom_call.1} parent=1 // pred_check
      _
    $region23: #{tpu_custom_call.1} parent=1 // pred_check_branch
      %706 = sbr.rel (0) target = $region25
    $region24: #{tpu_custom_call.1} parent=1 // pred_region
      %707 = dma.done [#allocation6], 256
    $region25: #{tpu_custom_call.1} parent=1 // pred_fallthru
      _
    %708 = vsyncpa [#allocation5], 1
    %709 = vsyncpa [#allocation8], 1
    %710 = vsyncpa [#allocation6], 1

</llo_original>
